<compile_context>
chip_gen: v7x
topology: tpu7x:2x2x1
jax: 0.10.0
libtpu: 0.0.40
codegen_flags: <defaults>
</compile_context>

<pallas_src>
import functools

import jax
import jax.numpy as jnp
from jax.experimental import pallas as pl
from jax.experimental.pallas import tpu as pltpu


# Synthetic stand-in for get_edge_feature_dims() (OGB-style bond features).
FULL_EDGE_FEATURE_DIMS = [5, 6, 2]


def _round_up(x, m):
    return ((x + m - 1) // m) * m


def _edge_encoder_kernel(attr_ref, table_ref, out_ref, *, num_feats, pack,
                         k_block, offsets):
    """attr_ref:  (tile_p, pack*F)            int32  (pack edges per row)
       table_ref: (pack*k_block, pack*emb)    f32    (block-diagonal table)
       out_ref:   (tile_p, pack*emb)          f32    (lane-dense packed out)
    """
    attr = attr_ref[...]                                   # (tile_p, pack*F)
    tile_p = attr.shape[0]
    lanes = pack * k_block                                 # contracting dim K
    iota = jax.lax.broadcasted_iota(jnp.int32, (tile_p, lanes), 1)

    # Build ONE combined one-hot: lane = g*k_block + offsets[i] + attr value.
    # pack*F compares (tiny, static, unrolled), all lanes disjoint.
    onehot = jnp.zeros((tile_p, lanes), jnp.float32)
    for g in range(pack):
        for i in range(num_feats):
            j = g * num_feats + i
            target = attr[:, j:j + 1] + (g * k_block + offsets[i])
            onehot = onehot + (iota == target).astype(jnp.float32)

    # Single K=pack*k_block, N=pack*emb matmul on the MXU.
    out_ref[...] = jnp.dot(onehot, table_ref[...],
                           preferred_element_type=jnp.float32)


def build_block_diag_table(tables, emb_dim, pack, k_block):
    """Stack per-feature tables row-wise, then replicate block-diagonally."""
    offsets = []
    combined = jnp.zeros((k_block, emb_dim), jnp.float32)
    off = 0
    for t in tables:
        offsets.append(off)
        combined = combined.at[off:off + t.shape[0], :].set(t)
        off += t.shape[0]
    assert off <= k_block
    bd = jnp.zeros((pack * k_block, pack * emb_dim), jnp.float32)
    for g in range(pack):
        bd = bd.at[g * k_block:(g + 1) * k_block,
                   g * emb_dim:(g + 1) * emb_dim].set(combined)
    return bd, tuple(offsets)


def edge_encoder_pallas(edge_attr, table_bd, offsets, *, emb_dim, pack,
                        k_block, tile_e=2048):
    """edge_attr: [E, F] int32 ; table_bd: [pack*k_block, pack*emb_dim] f32."""
    E, F = edge_attr.shape

    # tile_e: multiple of 8*pack; clamp for tiny E, pad E up for ragged E.
    tile_e = min(int(tile_e), _round_up(E, 8 * pack))
    tile_e = _round_up(tile_e, 8 * pack)
    E_pad = _round_up(E, tile_e)
    if E_pad != E:
        # Padded rows look up index 0 and are sliced off below.
        edge_attr = jnp.pad(edge_attr, ((0, E_pad - E), (0, 0)))

    # Pack `pack` edges per row (row-major reshape keeps edge order).
    packed_attr = edge_attr.reshape(E_pad // pack, pack * F)
    tile_p = tile_e // pack
    grid = (E_pad // tile_e,)

    kernel = functools.partial(
        _edge_encoder_kernel,
        num_feats=F, pack=pack, k_block=k_block, offsets=offsets)

    out_packed = pl.pallas_call(
        kernel,
        out_shape=jax.ShapeDtypeStruct((E_pad // pack, pack * emb_dim),
                                       jnp.float32),
        grid_spec=pltpu.PrefetchScalarGridSpec(
            num_scalar_prefetch=0,
            grid=grid,
            in_specs=[
                # packed indices: last dim == full array dim (pack*F)
                pl.BlockSpec((tile_p, pack * F), lambda e: (e, 0)),
                # resident (128,128)-ish block-diagonal table
                pl.BlockSpec((pack * k_block, pack * emb_dim),
                             lambda e: (0, 0)),
            ],
            out_specs=pl.BlockSpec((tile_p, pack * emb_dim),
                                   lambda e: (e, 0)),
        ),
        compiler_params=pltpu.CompilerParams(
            dimension_semantics=("parallel",)),  # lets v7x split across 2 TCs
    )(packed_attr, table_bd)

    # (E_pad/pack, pack*emb) -> (E_pad, emb): bit-identical row-major layout.
    return out_packed.reshape(E_pad, emb_dim)[:E]


def make_embedding_tables(key, feature_dims, emb_dim):
    """Xavier-uniform init per table (matches torch.nn.init.xavier_uniform_)."""
    tables = []
    for i, dim in enumerate(feature_dims):
        k = jax.random.fold_in(key, i)
        bound = (6.0 / (dim + emb_dim)) ** 0.5
        w = jax.random.uniform(k, (dim, emb_dim), jnp.float32, -bound, bound)
        tables.append(w)
    return tables


def edge_encoder_ref(edge_attr, tables):
    out = 0
    for i, t in enumerate(tables):
        out = out + t[edge_attr[:, i]]
    return out


if __name__ == "__main__":
    key = jax.random.PRNGKey(0)
    emb_dim = 32
    E = 128
    F = len(FULL_EDGE_FEATURE_DIMS)

    # Packing parameters: 4 edges per 128-lane output row, 32-row table blocks.
    pack = 128 // emb_dim if (emb_dim <= 128 and 128 % emb_dim == 0) else 1
    k_total = sum(FULL_EDGE_FEATURE_DIMS)
    k_block = max(_round_up(k_total, 8), 128 // pack)

    tables = make_embedding_tables(key, FULL_EDGE_FEATURE_DIMS, emb_dim)
    table_bd, offsets = build_block_diag_table(tables, emb_dim, pack, k_block)

    # Deterministic integer edge attributes, each column < its feature dim.
    # (Out-of-range indices would silently yield zero embeddings, unlike
    #  torch.nn.Embedding which raises -- validate upstream if needed.)
    cols = []
    for i, dim in enumerate(FULL_EDGE_FEATURE_DIMS):
        kc = jax.random.fold_in(jax.random.PRNGKey(1), i)
        cols.append(jax.random.randint(kc, (E, 1), 0, dim, jnp.int32))
    edge_attr = jnp.concatenate(cols, axis=1)  # (E, F) int32

    out = edge_encoder_pallas(edge_attr, table_bd, offsets,
                              emb_dim=emb_dim, pack=pack, k_block=k_block,
                              tile_e=2048)
    out = jax.block_until_ready(out)

    ref = edge_encoder_ref(edge_attr, tables)
    assert out.shape == (E, emb_dim)
    assert jnp.allclose(out, ref, atol=1e-5), "mismatch vs reference"

    print("KERNEL_OK")
</pallas_src>

<mosaic_0001>
module attributes {stable_mosaic.version = 11 : i64} {
  func.func @_edge_encoder_kernel(%arg0: i32, %arg1: memref<32x12xi32, #tpu.memory_space<vmem>>, %arg2: memref<128x128xf32, #tpu.memory_space<vmem>>, %arg3: memref<32x128xf32, #tpu.memory_space<vmem>>) attributes {dimension_semantics = [#tpu.dimension_semantics<parallel>], iteration_bounds = array<i64: 1>, scalar_prefetch = 0 : i64, scratch_operands = 0 : i64, tpu.core_type = #tpu.core_type<tc>, window_params = [{transform_indices = @transform_0, window_bounds = array<i64: 32, 12>}, {pipeline_mode = #tpu.pipeline_mode<synchronous>, transform_indices = @transform_1, window_bounds = array<i64: 128, 128>}, {transform_indices = @transform_2, window_bounds = array<i64: 32, 128>}]} {
    %c0 = arith.constant 0 : index
    %c0_0 = arith.constant 0 : index
    %0 = vector.load %arg1[%c0, %c0_0] : memref<32x12xi32, #tpu.memory_space<vmem>>, vector<32x12xi32>
    %1 = tpu.iota {dimensions = array<i32: 1>} : vector<32x128xi32>
    %cst = arith.constant 0.000000e+00 : f32
    %2 = vector.broadcast %cst : f32 to vector<32x128xf32>
    %3 = vector.extract_strided_slice %0 {offsets = [0, 0], sizes = [32, 1], strides = [1, 1]} : vector<32x12xi32> to vector<32x1xi32>
    %c0_i32 = arith.constant 0 : i32
    %4 = vector.broadcast %c0_i32 : i32 to vector<32x1xi32>
    %5 = arith.addi %3, %4 : vector<32x1xi32>
    %6 = vector.broadcast %5 : vector<32x1xi32> to vector<32x128xi32>
    %7 = arith.cmpi eq, %1, %6 : vector<32x128xi32>
    %8 = arith.extui %7 : vector<32x128xi1> to vector<32x128xi32>
    %9 = arith.sitofp %8 : vector<32x128xi32> to vector<32x128xf32>
    %10 = arith.addf %2, %9 : vector<32x128xf32>
    %11 = vector.extract_strided_slice %0 {offsets = [0, 1], sizes = [32, 1], strides = [1, 1]} : vector<32x12xi32> to vector<32x1xi32>
    %c5_i32 = arith.constant 5 : i32
    %12 = vector.broadcast %c5_i32 : i32 to vector<32x1xi32>
    %13 = arith.addi %11, %12 : vector<32x1xi32>
    %14 = vector.broadcast %13 : vector<32x1xi32> to vector<32x128xi32>
    %15 = arith.cmpi eq, %1, %14 : vector<32x128xi32>
    %16 = arith.extui %15 : vector<32x128xi1> to vector<32x128xi32>
    %17 = arith.sitofp %16 : vector<32x128xi32> to vector<32x128xf32>
    %18 = arith.addf %10, %17 : vector<32x128xf32>
    %19 = vector.extract_strided_slice %0 {offsets = [0, 2], sizes = [32, 1], strides = [1, 1]} : vector<32x12xi32> to vector<32x1xi32>
    %c11_i32 = arith.constant 11 : i32
    %20 = vector.broadcast %c11_i32 : i32 to vector<32x1xi32>
    %21 = arith.addi %19, %20 : vector<32x1xi32>
    %22 = vector.broadcast %21 : vector<32x1xi32> to vector<32x128xi32>
    %23 = arith.cmpi eq, %1, %22 : vector<32x128xi32>
    %24 = arith.extui %23 : vector<32x128xi1> to vector<32x128xi32>
    %25 = arith.sitofp %24 : vector<32x128xi32> to vector<32x128xf32>
    %26 = arith.addf %18, %25 : vector<32x128xf32>
    %27 = vector.extract_strided_slice %0 {offsets = [0, 3], sizes = [32, 1], strides = [1, 1]} : vector<32x12xi32> to vector<32x1xi32>
    %c32_i32 = arith.constant 32 : i32
    %28 = vector.broadcast %c32_i32 : i32 to vector<32x1xi32>
    %29 = arith.addi %27, %28 : vector<32x1xi32>
    %30 = vector.broadcast %29 : vector<32x1xi32> to vector<32x128xi32>
    %31 = arith.cmpi eq, %1, %30 : vector<32x128xi32>
    %32 = arith.extui %31 : vector<32x128xi1> to vector<32x128xi32>
    %33 = arith.sitofp %32 : vector<32x128xi32> to vector<32x128xf32>
    %34 = arith.addf %26, %33 : vector<32x128xf32>
    %35 = vector.extract_strided_slice %0 {offsets = [0, 4], sizes = [32, 1], strides = [1, 1]} : vector<32x12xi32> to vector<32x1xi32>
    %c37_i32 = arith.constant 37 : i32
    %36 = vector.broadcast %c37_i32 : i32 to vector<32x1xi32>
    %37 = arith.addi %35, %36 : vector<32x1xi32>
    %38 = vector.broadcast %37 : vector<32x1xi32> to vector<32x128xi32>
    %39 = arith.cmpi eq, %1, %38 : vector<32x128xi32>
    %40 = arith.extui %39 : vector<32x128xi1> to vector<32x128xi32>
    %41 = arith.sitofp %40 : vector<32x128xi32> to vector<32x128xf32>
    %42 = arith.addf %34, %41 : vector<32x128xf32>
    %43 = vector.extract_strided_slice %0 {offsets = [0, 5], sizes = [32, 1], strides = [1, 1]} : vector<32x12xi32> to vector<32x1xi32>
    %c43_i32 = arith.constant 43 : i32
    %44 = vector.broadcast %c43_i32 : i32 to vector<32x1xi32>
    %45 = arith.addi %43, %44 : vector<32x1xi32>
    %46 = vector.broadcast %45 : vector<32x1xi32> to vector<32x128xi32>
    %47 = arith.cmpi eq, %1, %46 : vector<32x128xi32>
    %48 = arith.extui %47 : vector<32x128xi1> to vector<32x128xi32>
    %49 = arith.sitofp %48 : vector<32x128xi32> to vector<32x128xf32>
    %50 = arith.addf %42, %49 : vector<32x128xf32>
    %51 = vector.extract_strided_slice %0 {offsets = [0, 6], sizes = [32, 1], strides = [1, 1]} : vector<32x12xi32> to vector<32x1xi32>
    %c64_i32 = arith.constant 64 : i32
    %52 = vector.broadcast %c64_i32 : i32 to vector<32x1xi32>
    %53 = arith.addi %51, %52 : vector<32x1xi32>
    %54 = vector.broadcast %53 : vector<32x1xi32> to vector<32x128xi32>
    %55 = arith.cmpi eq, %1, %54 : vector<32x128xi32>
    %56 = arith.extui %55 : vector<32x128xi1> to vector<32x128xi32>
    %57 = arith.sitofp %56 : vector<32x128xi32> to vector<32x128xf32>
    %58 = arith.addf %50, %57 : vector<32x128xf32>
    %59 = vector.extract_strided_slice %0 {offsets = [0, 7], sizes = [32, 1], strides = [1, 1]} : vector<32x12xi32> to vector<32x1xi32>
    %c69_i32 = arith.constant 69 : i32
    %60 = vector.broadcast %c69_i32 : i32 to vector<32x1xi32>
    %61 = arith.addi %59, %60 : vector<32x1xi32>
    %62 = vector.broadcast %61 : vector<32x1xi32> to vector<32x128xi32>
    %63 = arith.cmpi eq, %1, %62 : vector<32x128xi32>
    %64 = arith.extui %63 : vector<32x128xi1> to vector<32x128xi32>
    %65 = arith.sitofp %64 : vector<32x128xi32> to vector<32x128xf32>
    %66 = arith.addf %58, %65 : vector<32x128xf32>
    %67 = vector.extract_strided_slice %0 {offsets = [0, 8], sizes = [32, 1], strides = [1, 1]} : vector<32x12xi32> to vector<32x1xi32>
    %c75_i32 = arith.constant 75 : i32
    %68 = vector.broadcast %c75_i32 : i32 to vector<32x1xi32>
    %69 = arith.addi %67, %68 : vector<32x1xi32>
    %70 = vector.broadcast %69 : vector<32x1xi32> to vector<32x128xi32>
    %71 = arith.cmpi eq, %1, %70 : vector<32x128xi32>
    %72 = arith.extui %71 : vector<32x128xi1> to vector<32x128xi32>
    %73 = arith.sitofp %72 : vector<32x128xi32> to vector<32x128xf32>
    %74 = arith.addf %66, %73 : vector<32x128xf32>
    %75 = vector.extract_strided_slice %0 {offsets = [0, 9], sizes = [32, 1], strides = [1, 1]} : vector<32x12xi32> to vector<32x1xi32>
    %c96_i32 = arith.constant 96 : i32
    %76 = vector.broadcast %c96_i32 : i32 to vector<32x1xi32>
    %77 = arith.addi %75, %76 : vector<32x1xi32>
    %78 = vector.broadcast %77 : vector<32x1xi32> to vector<32x128xi32>
    %79 = arith.cmpi eq, %1, %78 : vector<32x128xi32>
    %80 = arith.extui %79 : vector<32x128xi1> to vector<32x128xi32>
    %81 = arith.sitofp %80 : vector<32x128xi32> to vector<32x128xf32>
    %82 = arith.addf %74, %81 : vector<32x128xf32>
    %83 = vector.extract_strided_slice %0 {offsets = [0, 10], sizes = [32, 1], strides = [1, 1]} : vector<32x12xi32> to vector<32x1xi32>
    %c101_i32 = arith.constant 101 : i32
    %84 = vector.broadcast %c101_i32 : i32 to vector<32x1xi32>
    %85 = arith.addi %83, %84 : vector<32x1xi32>
    %86 = vector.broadcast %85 : vector<32x1xi32> to vector<32x128xi32>
    %87 = arith.cmpi eq, %1, %86 : vector<32x128xi32>
    %88 = arith.extui %87 : vector<32x128xi1> to vector<32x128xi32>
    %89 = arith.sitofp %88 : vector<32x128xi32> to vector<32x128xf32>
    %90 = arith.addf %82, %89 : vector<32x128xf32>
    %91 = vector.extract_strided_slice %0 {offsets = [0, 11], sizes = [32, 1], strides = [1, 1]} : vector<32x12xi32> to vector<32x1xi32>
    %c107_i32 = arith.constant 107 : i32
    %92 = vector.broadcast %c107_i32 : i32 to vector<32x1xi32>
    %93 = arith.addi %91, %92 : vector<32x1xi32>
    %94 = vector.broadcast %93 : vector<32x1xi32> to vector<32x128xi32>
    %95 = arith.cmpi eq, %1, %94 : vector<32x128xi32>
    %96 = arith.extui %95 : vector<32x128xi1> to vector<32x128xi32>
    %97 = arith.sitofp %96 : vector<32x128xi32> to vector<32x128xf32>
    %98 = arith.addf %90, %97 : vector<32x128xf32>
    %c0_1 = arith.constant 0 : index
    %c0_2 = arith.constant 0 : index
    %99 = vector.load %arg2[%c0_1, %c0_2] : memref<128x128xf32, #tpu.memory_space<vmem>>, vector<128x128xf32>
    %cst_3 = arith.constant dense<0.000000e+00> : vector<32x128xf32>
    %100 = tpu.matmul %98, %99, %cst_3 {dimension_numbers = #tpu.dot_dimension_numbers<[1], [0], [0], [1], [0, 0, 1, 1], [], []>} : vector<32x128xf32>, vector<128x128xf32>, vector<32x128xf32> -> vector<32x128xf32>
    %c0_4 = arith.constant 0 : index
    %c0_5 = arith.constant 0 : index
    %101 = vector.load %arg3[%c0_4, %c0_5] : memref<32x128xf32, #tpu.memory_space<vmem>>, vector<32x128xf32>
    tpu.vector_store %arg3[%c0_4, %c0_5], %100 {strides = array<i32>} : memref<32x128xf32, #tpu.memory_space<vmem>>, vector<32x128xf32>,
    return
  }
  func.func @transform_0(%arg0: i32) -> (i32, i32) {
    %c0_i32 = arith.constant 0 : i32
    %c0_i32_0 = arith.constant 0 : i32
    return %arg0, %c0_i32 : i32, i32
  }
  func.func @transform_1(%arg0: i32) -> (i32, i32) {
    %c0_i32 = arith.constant 0 : i32
    %c0_i32_0 = arith.constant 0 : i32
    %c0_i32_1 = arith.constant 0 : i32
    return %c0_i32, %c0_i32_0 : i32, i32
  }
  func.func @transform_2(%arg0: i32) -> (i32, i32) {
    %c0_i32 = arith.constant 0 : i32
    %c0_i32_0 = arith.constant 0 : i32
    return %arg0, %c0_i32 : i32, i32
  }
}

</mosaic_0001>

<llo_original>
// kernel: tpu_custom_call.1
$region0: #{tpu_custom_call.1}
  #allocation0 [shape = 'u32[]', space=smem, size = 0x4, offset = 0x4, fixed_abs, tag = 'smem constant byte address 0x4 - core index']
  #allocation1 [shape = 'u32[144,128]{1,0:T(1,128)}', space=vmem, size = 0x12000, scoped, tag = 'internal scratch']
  %s0 = inlined_call_operand.vmem [shape: s32[32,12], index: 0, kind: input, shape index: {}]
  %s1 = inlined_call_operand.hbm [shape: f32[128,128], index: 1, kind: input, shape index: {}]
  %s2 = inlined_call_operand.hbm [shape: f32[32,128], index: 2, kind: output, shape index: {}]
  %s3 = sld [smem:[#allocation0]]
  $region22: #{tpu_custom_call.1} parent=0
    _
  %s5 = ssub.s32 1, %s3
  %s6 = scalar_select 0, %s5, %s3
  $region1: #{tpu_custom_call.1} parent=0
    #allocation2 [shape = 'u8[65536]{0}', space=vmem, size = 0x10000, scoped, tag = 'input window, operand 1, single buffered']
    #allocation3 [shape = 's32[1]{0}', space=sflag, size = 0x4, scoped, tag = 'scoped memory for tpu_custom_call.1']
    #allocation4 [shape = 's32[1]{0}', space=sflag, size = 0x4, scoped, tag = 'scoped memory for tpu_custom_call.1']
    #allocation5 [shape = 'u8[16384]{0}', space=vmem, size = 0x4000, scoped, tag = 'output window, operand 0, single buffered']
    %7 = vsyncpa [#allocation3], 0
    %8 = vsyncpa [#allocation4], 0
    // Predicated region
    $region2: #{tpu_custom_call.1} parent=1 // pred_check
      _
    $region3: #{tpu_custom_call.1} parent=1 // pred_check_branch
      %10 = sbr.rel (0) target = $region5
    $region4: #{tpu_custom_call.1} parent=1 // pred_region
      _
    $region5: #{tpu_custom_call.1} parent=1 // pred_fallthru
      _
    // Predicated region
    $region6: #{tpu_custom_call.1} parent=1 // pred_check
      _
    $region7: #{tpu_custom_call.1} parent=1 // pred_check_branch
      %12 = sbr.rel (0) target = $region9
    $region8: #{tpu_custom_call.1} parent=1 // pred_region
      %s14 = ssub.s32 2048, 2048
      %15 = vsyncadd [#allocation3], %s14
      %s16 = sshll.u32 [#allocation2], 4
      %s17 = int_to_ptr.vmem [resolvable:$true] %s16
      %22 = dma.hbm_to_vmem [thread:$0]  %s1, 2048, %s17, [#allocation3], 128, 128, 8
    $region9: #{tpu_custom_call.1} parent=1 // pred_fallthru
      _
    // Predicated region
    $region10: #{tpu_custom_call.1} parent=1 // pred_check
      _
    $region11: #{tpu_custom_call.1} parent=1 // pred_check_branch
      %24 = sbr.rel (0) target = $region13
    $region12: #{tpu_custom_call.1} parent=1 // pred_region
      %25 = dma.done [#allocation3], 2048
    $region13: #{tpu_custom_call.1} parent=1 // pred_fallthru
      _
    %v26 = vld [vmem:[%s0] sm:$0xff]
    %v27 = vld [vmem:[%s0 + $0x8] sm:$0xff]
    %v28 = vld [vmem:[%s0 + $0x10] sm:$0xff]
    %v29 = vld [vmem:[%s0 + $0x18] sm:$0xff]
    %v30 = vlaneseq
    %v31 = vand.u32 %v30, 127
    %32 = vset.pattern.permute.xlu0 0
    %33 = vperm.xlu0 %32, %v26
    %v34 = vpop.permute.xlu0 %33
    %35 = vset.pattern.permute.xlu0 0
    %36 = vperm.xlu0 %35, %v27
    %v37 = vpop.permute.xlu0 %36
    %38 = vset.pattern.permute.xlu0 0
    %39 = vperm.xlu0 %38, %v28
    %v40 = vpop.permute.xlu0 %39
    %41 = vset.pattern.permute.xlu0 0
    %42 = vperm.xlu0 %41, %v29
    %v43 = vpop.permute.xlu0 %42
    %vm44 = vcmp.eq.s32.totalorder %v31, %v34
    %vm45 = vcmp.eq.s32.totalorder %v31, %v37
    %vm46 = vcmp.eq.s32.totalorder %v31, %v40
    %vm47 = vcmp.eq.s32.totalorder %v31, %v43
    %v48 = vsel %vm44, 1, 0
    %v49 = vsel %vm45, 1, 0
    %v50 = vsel %vm46, 1, 0
    %v51 = vsel %vm47, 1, 0
    %v52 = vcvt.s32.f32 %v48
    %v53 = vcvt.s32.f32 %v49
    %v54 = vcvt.s32.f32 %v50
    %v55 = vcvt.s32.f32 %v51
    %v56 = vadd.f32 %v52, 0.0
    %v57 = vadd.f32 %v53, 0.0
    %v58 = vadd.f32 %v54, 0.0
    %v59 = vadd.f32 %v55, 0.0
    %v60 = vadd.s32 %v26, 5
    %v61 = vadd.s32 %v27, 5
    %v62 = vadd.s32 %v28, 5
    %v63 = vadd.s32 %v29, 5
    %64 = vset.pattern.permute.xlu0 1
    %65 = vperm.xlu0 %64, %v60
    %v66 = vpop.permute.xlu0 %65
    %67 = vset.pattern.permute.xlu0 1
    %68 = vperm.xlu0 %67, %v61
    %v69 = vpop.permute.xlu0 %68
    %70 = vset.pattern.permute.xlu0 1
    %71 = vperm.xlu0 %70, %v62
    %v72 = vpop.permute.xlu0 %71
    %73 = vset.pattern.permute.xlu0 1
    %74 = vperm.xlu0 %73, %v63
    %v75 = vpop.permute.xlu0 %74
    %vm76 = vcmp.eq.s32.totalorder %v31, %v66
    %vm77 = vcmp.eq.s32.totalorder %v31, %v69
    %vm78 = vcmp.eq.s32.totalorder %v31, %v72
    %vm79 = vcmp.eq.s32.totalorder %v31, %v75
    %v80 = vsel %vm76, 1, 0
    %v81 = vsel %vm77, 1, 0
    %v82 = vsel %vm78, 1, 0
    %v83 = vsel %vm79, 1, 0
    %v84 = vcvt.s32.f32 %v80
    %v85 = vcvt.s32.f32 %v81
    %v86 = vcvt.s32.f32 %v82
    %v87 = vcvt.s32.f32 %v83
    %v88 = vadd.f32 %v56, %v84
    %v89 = vadd.f32 %v57, %v85
    %v90 = vadd.f32 %v58, %v86
    %v91 = vadd.f32 %v59, %v87
    %v92 = vadd.s32 %v26, 11
    %v93 = vadd.s32 %v27, 11
    %v94 = vadd.s32 %v28, 11
    %v95 = vadd.s32 %v29, 11
    %96 = vset.pattern.permute.xlu0 2
    %97 = vperm.xlu0 %96, %v92
    %v98 = vpop.permute.xlu0 %97
    %99 = vset.pattern.permute.xlu0 2
    %100 = vperm.xlu0 %99, %v93
    %v101 = vpop.permute.xlu0 %100
    %102 = vset.pattern.permute.xlu0 2
    %103 = vperm.xlu0 %102, %v94
    %v104 = vpop.permute.xlu0 %103
    %105 = vset.pattern.permute.xlu0 2
    %106 = vperm.xlu0 %105, %v95
    %v107 = vpop.permute.xlu0 %106
    %vm108 = vcmp.eq.s32.totalorder %v31, %v98
    %vm109 = vcmp.eq.s32.totalorder %v31, %v101
    %vm110 = vcmp.eq.s32.totalorder %v31, %v104
    %vm111 = vcmp.eq.s32.totalorder %v31, %v107
    %v112 = vsel %vm108, 1, 0
    %v113 = vsel %vm109, 1, 0
    %v114 = vsel %vm110, 1, 0
    %v115 = vsel %vm111, 1, 0
    %v116 = vcvt.s32.f32 %v112
    %v117 = vcvt.s32.f32 %v113
    %v118 = vcvt.s32.f32 %v114
    %v119 = vcvt.s32.f32 %v115
    %v120 = vadd.f32 %v88, %v116
    %v121 = vadd.f32 %v89, %v117
    %v122 = vadd.f32 %v90, %v118
    %v123 = vadd.f32 %v91, %v119
    %v124 = vadd.s32 %v26, 32
    %v125 = vadd.s32 %v27, 32
    %v126 = vadd.s32 %v28, 32
    %v127 = vadd.s32 %v29, 32
    %128 = vset.pattern.permute.xlu0 3
    %129 = vperm.xlu0 %128, %v124
    %v130 = vpop.permute.xlu0 %129
    %131 = vset.pattern.permute.xlu0 3
    %132 = vperm.xlu0 %131, %v125
    %v133 = vpop.permute.xlu0 %132
    %134 = vset.pattern.permute.xlu0 3
    %135 = vperm.xlu0 %134, %v126
    %v136 = vpop.permute.xlu0 %135
    %137 = vset.pattern.permute.xlu0 3
    %138 = vperm.xlu0 %137, %v127
    %v139 = vpop.permute.xlu0 %138
    %vm140 = vcmp.eq.s32.totalorder %v31, %v130
    %vm141 = vcmp.eq.s32.totalorder %v31, %v133
    %vm142 = vcmp.eq.s32.totalorder %v31, %v136
    %vm143 = vcmp.eq.s32.totalorder %v31, %v139
    %v144 = vsel %vm140, 1, 0
    %v145 = vsel %vm141, 1, 0
    %v146 = vsel %vm142, 1, 0
    %v147 = vsel %vm143, 1, 0
    %v148 = vcvt.s32.f32 %v144
    %v149 = vcvt.s32.f32 %v145
    %v150 = vcvt.s32.f32 %v146
    %v151 = vcvt.s32.f32 %v147
    %v152 = vadd.f32 %v120, %v148
    %v153 = vadd.f32 %v121, %v149
    %v154 = vadd.f32 %v122, %v150
    %v155 = vadd.f32 %v123, %v151
    %v156 = vadd.s32 %v26, 37
    %v157 = vadd.s32 %v27, 37
    %v158 = vadd.s32 %v28, 37
    %v159 = vadd.s32 %v29, 37
    %160 = vset.pattern.permute.xlu0 4
    %161 = vperm.xlu0 %160, %v156
    %v162 = vpop.permute.xlu0 %161
    %163 = vset.pattern.permute.xlu0 4
    %164 = vperm.xlu0 %163, %v157
    %v165 = vpop.permute.xlu0 %164
    %166 = vset.pattern.permute.xlu0 4
    %167 = vperm.xlu0 %166, %v158
    %v168 = vpop.permute.xlu0 %167
    %169 = vset.pattern.permute.xlu0 4
    %170 = vperm.xlu0 %169, %v159
    %v171 = vpop.permute.xlu0 %170
    %vm172 = vcmp.eq.s32.totalorder %v31, %v162
    %vm173 = vcmp.eq.s32.totalorder %v31, %v165
    %vm174 = vcmp.eq.s32.totalorder %v31, %v168
    %vm175 = vcmp.eq.s32.totalorder %v31, %v171
    %v176 = vsel %vm172, 1, 0
    %v177 = vsel %vm173, 1, 0
    %v178 = vsel %vm174, 1, 0
    %v179 = vsel %vm175, 1, 0
    %v180 = vcvt.s32.f32 %v176
    %v181 = vcvt.s32.f32 %v177
    %v182 = vcvt.s32.f32 %v178
    %v183 = vcvt.s32.f32 %v179
    %v184 = vadd.f32 %v152, %v180
    %v185 = vadd.f32 %v153, %v181
    %v186 = vadd.f32 %v154, %v182
    %v187 = vadd.f32 %v155, %v183
    %v188 = vadd.s32 %v26, 43
    %v189 = vadd.s32 %v27, 43
    %v190 = vadd.s32 %v28, 43
    %v191 = vadd.s32 %v29, 43
    %192 = vset.pattern.permute.xlu0 5
    %193 = vperm.xlu0 %192, %v188
    %v194 = vpop.permute.xlu0 %193
    %195 = vset.pattern.permute.xlu0 5
    %196 = vperm.xlu0 %195, %v189
    %v197 = vpop.permute.xlu0 %196
    %198 = vset.pattern.permute.xlu0 5
    %199 = vperm.xlu0 %198, %v190
    %v200 = vpop.permute.xlu0 %199
    %201 = vset.pattern.permute.xlu0 5
    %202 = vperm.xlu0 %201, %v191
    %v203 = vpop.permute.xlu0 %202
    %vm204 = vcmp.eq.s32.totalorder %v31, %v194
    %vm205 = vcmp.eq.s32.totalorder %v31, %v197
    %vm206 = vcmp.eq.s32.totalorder %v31, %v200
    %vm207 = vcmp.eq.s32.totalorder %v31, %v203
    %v208 = vsel %vm204, 1, 0
    %v209 = vsel %vm205, 1, 0
    %v210 = vsel %vm206, 1, 0
    %v211 = vsel %vm207, 1, 0
    %v212 = vcvt.s32.f32 %v208
    %v213 = vcvt.s32.f32 %v209
    %v214 = vcvt.s32.f32 %v210
    %v215 = vcvt.s32.f32 %v211
    %v216 = vadd.f32 %v184, %v212
    %v217 = vadd.f32 %v185, %v213
    %v218 = vadd.f32 %v186, %v214
    %v219 = vadd.f32 %v187, %v215
    %v220 = vadd.s32 %v26, 64
    %v221 = vadd.s32 %v27, 64
    %v222 = vadd.s32 %v28, 64
    %v223 = vadd.s32 %v29, 64
    %224 = vset.pattern.permute.xlu0 6
    %225 = vperm.xlu0 %224, %v220
    %v226 = vpop.permute.xlu0 %225
    %227 = vset.pattern.permute.xlu0 6
    %228 = vperm.xlu0 %227, %v221
    %v229 = vpop.permute.xlu0 %228
    %230 = vset.pattern.permute.xlu0 6
    %231 = vperm.xlu0 %230, %v222
    %v232 = vpop.permute.xlu0 %231
    %233 = vset.pattern.permute.xlu0 6
    %234 = vperm.xlu0 %233, %v223
    %v235 = vpop.permute.xlu0 %234
    %vm236 = vcmp.eq.s32.totalorder %v31, %v226
    %vm237 = vcmp.eq.s32.totalorder %v31, %v229
    %vm238 = vcmp.eq.s32.totalorder %v31, %v232
    %vm239 = vcmp.eq.s32.totalorder %v31, %v235
    %v240 = vsel %vm236, 1, 0
    %v241 = vsel %vm237, 1, 0
    %v242 = vsel %vm238, 1, 0
    %v243 = vsel %vm239, 1, 0
    %v244 = vcvt.s32.f32 %v240
    %v245 = vcvt.s32.f32 %v241
    %v246 = vcvt.s32.f32 %v242
    %v247 = vcvt.s32.f32 %v243
    %v248 = vadd.f32 %v216, %v244
    %v249 = vadd.f32 %v217, %v245
    %v250 = vadd.f32 %v218, %v246
    %v251 = vadd.f32 %v219, %v247
    %v252 = vadd.s32 %v26, 69
    %v253 = vadd.s32 %v27, 69
    %v254 = vadd.s32 %v28, 69
    %v255 = vadd.s32 %v29, 69
    %256 = vset.pattern.permute.xlu0 7
    %257 = vperm.xlu0 %256, %v252
    %v258 = vpop.permute.xlu0 %257
    %259 = vset.pattern.permute.xlu0 7
    %260 = vperm.xlu0 %259, %v253
    %v261 = vpop.permute.xlu0 %260
    %262 = vset.pattern.permute.xlu0 7
    %263 = vperm.xlu0 %262, %v254
    %v264 = vpop.permute.xlu0 %263
    %265 = vset.pattern.permute.xlu0 7
    %266 = vperm.xlu0 %265, %v255
    %v267 = vpop.permute.xlu0 %266
    %vm268 = vcmp.eq.s32.totalorder %v31, %v258
    %vm269 = vcmp.eq.s32.totalorder %v31, %v261
    %vm270 = vcmp.eq.s32.totalorder %v31, %v264
    %vm271 = vcmp.eq.s32.totalorder %v31, %v267
    %v272 = vsel %vm268, 1, 0
    %v273 = vsel %vm269, 1, 0
    %v274 = vsel %vm270, 1, 0
    %v275 = vsel %vm271, 1, 0
    %v276 = vcvt.s32.f32 %v272
    %v277 = vcvt.s32.f32 %v273
    %v278 = vcvt.s32.f32 %v274
    %v279 = vcvt.s32.f32 %v275
    %v280 = vadd.f32 %v248, %v276
    %v281 = vadd.f32 %v249, %v277
    %v282 = vadd.f32 %v250, %v278
    %v283 = vadd.f32 %v251, %v279
    %v284 = vadd.s32 %v26, 75
    %v285 = vadd.s32 %v27, 75
    %v286 = vadd.s32 %v28, 75
    %v287 = vadd.s32 %v29, 75
    %288 = vset.pattern.permute.xlu0 8
    %289 = vperm.xlu0 %288, %v284
    %v290 = vpop.permute.xlu0 %289
    %291 = vset.pattern.permute.xlu0 8
    %292 = vperm.xlu0 %291, %v285
    %v293 = vpop.permute.xlu0 %292
    %294 = vset.pattern.permute.xlu0 8
    %295 = vperm.xlu0 %294, %v286
    %v296 = vpop.permute.xlu0 %295
    %297 = vset.pattern.permute.xlu0 8
    %298 = vperm.xlu0 %297, %v287
    %v299 = vpop.permute.xlu0 %298
    %vm300 = vcmp.eq.s32.totalorder %v31, %v290
    %vm301 = vcmp.eq.s32.totalorder %v31, %v293
    %vm302 = vcmp.eq.s32.totalorder %v31, %v296
    %vm303 = vcmp.eq.s32.totalorder %v31, %v299
    %v304 = vsel %vm300, 1, 0
    %v305 = vsel %vm301, 1, 0
    %v306 = vsel %vm302, 1, 0
    %v307 = vsel %vm303, 1, 0
    %v308 = vcvt.s32.f32 %v304
    %v309 = vcvt.s32.f32 %v305
    %v310 = vcvt.s32.f32 %v306
    %v311 = vcvt.s32.f32 %v307
    %v312 = vadd.f32 %v280, %v308
    %v313 = vadd.f32 %v281, %v309
    %v314 = vadd.f32 %v282, %v310
    %v315 = vadd.f32 %v283, %v311
    %v316 = vadd.s32 %v26, 96
    %v317 = vadd.s32 %v27, 96
    %v318 = vadd.s32 %v28, 96
    %v319 = vadd.s32 %v29, 96
    %320 = vset.pattern.permute.xlu0 9
    %321 = vperm.xlu0 %320, %v316
    %v322 = vpop.permute.xlu0 %321
    %323 = vset.pattern.permute.xlu0 9
    %324 = vperm.xlu0 %323, %v317
    %v325 = vpop.permute.xlu0 %324
    %326 = vset.pattern.permute.xlu0 9
    %327 = vperm.xlu0 %326, %v318
    %v328 = vpop.permute.xlu0 %327
    %329 = vset.pattern.permute.xlu0 9
    %330 = vperm.xlu0 %329, %v319
    %v331 = vpop.permute.xlu0 %330
    %vm332 = vcmp.eq.s32.totalorder %v31, %v322
    %vm333 = vcmp.eq.s32.totalorder %v31, %v325
    %vm334 = vcmp.eq.s32.totalorder %v31, %v328
    %vm335 = vcmp.eq.s32.totalorder %v31, %v331
    %v336 = vsel %vm332, 1, 0
    %v337 = vsel %vm333, 1, 0
    %v338 = vsel %vm334, 1, 0
    %v339 = vsel %vm335, 1, 0
    %v340 = vcvt.s32.f32 %v336
    %v341 = vcvt.s32.f32 %v337
    %v342 = vcvt.s32.f32 %v338
    %v343 = vcvt.s32.f32 %v339
    %v344 = vadd.f32 %v312, %v340
    %v345 = vadd.f32 %v313, %v341
    %v346 = vadd.f32 %v314, %v342
    %v347 = vadd.f32 %v315, %v343
    %v348 = vadd.s32 %v26, 101
    %v349 = vadd.s32 %v27, 101
    %v350 = vadd.s32 %v28, 101
    %v351 = vadd.s32 %v29, 101
    %352 = vset.pattern.permute.xlu0 10
    %353 = vperm.xlu0 %352, %v348
    %v354 = vpop.permute.xlu0 %353
    %355 = vset.pattern.permute.xlu0 10
    %356 = vperm.xlu0 %355, %v349
    %v357 = vpop.permute.xlu0 %356
    %358 = vset.pattern.permute.xlu0 10
    %359 = vperm.xlu0 %358, %v350
    %v360 = vpop.permute.xlu0 %359
    %361 = vset.pattern.permute.xlu0 10
    %362 = vperm.xlu0 %361, %v351
    %v363 = vpop.permute.xlu0 %362
    %vm364 = vcmp.eq.s32.totalorder %v31, %v354
    %vm365 = vcmp.eq.s32.totalorder %v31, %v357
    %vm366 = vcmp.eq.s32.totalorder %v31, %v360
    %vm367 = vcmp.eq.s32.totalorder %v31, %v363
    %v368 = vsel %vm364, 1, 0
    %v369 = vsel %vm365, 1, 0
    %v370 = vsel %vm366, 1, 0
    %v371 = vsel %vm367, 1, 0
    %v372 = vcvt.s32.f32 %v368
    %v373 = vcvt.s32.f32 %v369
    %v374 = vcvt.s32.f32 %v370
    %v375 = vcvt.s32.f32 %v371
    %v376 = vadd.f32 %v344, %v372
    %v377 = vadd.f32 %v345, %v373
    %v378 = vadd.f32 %v346, %v374
    %v379 = vadd.f32 %v347, %v375
    %v380 = vadd.s32 %v26, 107
    %v381 = vadd.s32 %v27, 107
    %v382 = vadd.s32 %v28, 107
    %v383 = vadd.s32 %v29, 107
    %384 = vset.pattern.permute.xlu0 11
    %385 = vperm.xlu0 %384, %v380
    %v386 = vpop.permute.xlu0 %385
    %387 = vset.pattern.permute.xlu0 11
    %388 = vperm.xlu0 %387, %v381
    %v389 = vpop.permute.xlu0 %388
    %390 = vset.pattern.permute.xlu0 11
    %391 = vperm.xlu0 %390, %v382
    %v392 = vpop.permute.xlu0 %391
    %393 = vset.pattern.permute.xlu0 11
    %394 = vperm.xlu0 %393, %v383
    %v395 = vpop.permute.xlu0 %394
    %vm396 = vcmp.eq.s32.totalorder %v31, %v386
    %vm397 = vcmp.eq.s32.totalorder %v31, %v389
    %vm398 = vcmp.eq.s32.totalorder %v31, %v392
    %vm399 = vcmp.eq.s32.totalorder %v31, %v395
    %v400 = vsel %vm396, 1, 0
    %v401 = vsel %vm397, 1, 0
    %v402 = vsel %vm398, 1, 0
    %v403 = vsel %vm399, 1, 0
    %v404 = vcvt.s32.f32 %v400
    %v405 = vcvt.s32.f32 %v401
    %v406 = vcvt.s32.f32 %v402
    %v407 = vcvt.s32.f32 %v403
    %v408 = vadd.f32 %v376, %v404
    %v409 = vadd.f32 %v377, %v405
    %v410 = vadd.f32 %v378, %v406
    %v411 = vadd.f32 %v379, %v407
    %v412 = vld [vmem:[#allocation2] sm:$0xff]
    %v413 = vld [vmem:[#allocation2 + $0x8] sm:$0xff]
    %v414 = vld [vmem:[#allocation2 + $0x10] sm:$0xff]
    %v415 = vld [vmem:[#allocation2 + $0x18] sm:$0xff]
    %v416 = vld [vmem:[#allocation2 + $0x20] sm:$0xff]
    %v417 = vld [vmem:[#allocation2 + $0x28] sm:$0xff]
    %v418 = vld [vmem:[#allocation2 + $0x30] sm:$0xff]
    %v419 = vld [vmem:[#allocation2 + $0x38] sm:$0xff]
    %v420 = vld [vmem:[#allocation2 + $0x40] sm:$0xff]
    %v421 = vld [vmem:[#allocation2 + $0x48] sm:$0xff]
    %v422 = vld [vmem:[#allocation2 + $0x50] sm:$0xff]
    %v423 = vld [vmem:[#allocation2 + $0x58] sm:$0xff]
    %v424 = vld [vmem:[#allocation2 + $0x60] sm:$0xff]
    %v425 = vld [vmem:[#allocation2 + $0x68] sm:$0xff]
    %v426 = vld [vmem:[#allocation2 + $0x70] sm:$0xff]
    %v427 = vld [vmem:[#allocation2 + $0x78] sm:$0xff]
    %428 = vmatprep.subr.mxu0 0.0
    %429 = vmatpush1.msra.mxu0 %v412
    %430 = vmatprep.subr.mxu0 0.0
    %431 = vmatpush1.msra.mxu0 %v413
    %432 = vmatprep.subr.mxu0 0.0
    %433 = vmatpush1.msra.mxu0 %v414
    %434 = vmatprep.subr.mxu0 0.0
    %435 = vmatpush1.msra.mxu0 %v415
    %436 = vmatprep.subr.mxu0 0.0
    %437 = vmatpush1.msra.mxu0 %v416
    %438 = vmatprep.subr.mxu0 0.0
    %439 = vmatpush1.msra.mxu0 %v417
    %440 = vmatprep.subr.mxu0 0.0
    %441 = vmatpush1.msra.mxu0 %v418
    %442 = vmatprep.subr.mxu0 0.0
    %443 = vmatpush1.msra.mxu0 %v419
    %444 = vmatprep.subr.mxu0 0.0
    %445 = vmatpush1.msra.mxu0 %v420
    %446 = vmatprep.subr.mxu0 0.0
    %447 = vmatpush1.msra.mxu0 %v421
    %448 = vmatprep.subr.mxu0 0.0
    %449 = vmatpush1.msra.mxu0 %v422
    %450 = vmatprep.subr.mxu0 0.0
    %451 = vmatpush1.msra.mxu0 %v423
    %452 = vmatprep.subr.mxu0 0.0
    %453 = vmatpush1.msra.mxu0 %v424
    %454 = vmatprep.subr.mxu0 0.0
    %455 = vmatpush1.msra.mxu0 %v425
    %456 = vmatprep.subr.mxu0 0.0
    %457 = vmatpush1.msra.mxu0 %v426
    %458 = vmatprep.subr.mxu0 0.0
    %459 = vmatpush1.msra.mxu0 %v427
    %460 = vmatprep.subr.mxu0 0.0
    %461 = vmatpush1.msra.mxu0 0.0
    %462 = vmatprep.subr.mxu0 0.0
    %463 = vmatpush1.msra.mxu0 0.0
    %464 = vmatprep.subr.mxu0 0.0
    %465 = vmatpush1.msra.mxu0 0.0
    %466 = vmatprep.subr.mxu0 0.0
    %467 = vmatpush1.msra.mxu0 0.0
    %468 = vmatprep.subr.mxu0 0.0
    %469 = vmatpush1.msra.mxu0 0.0
    %470 = vmatprep.subr.mxu0 0.0
    %471 = vmatpush1.msra.mxu0 0.0
    %472 = vmatprep.subr.mxu0 0.0
    %473 = vmatpush1.msra.mxu0 0.0
    %474 = vmatprep.subr.mxu0 0.0
    %475 = vmatpush1.msra.mxu0 0.0
    %476 = vmatprep.subr.mxu0 0.0
    %477 = vmatpush1.msra.mxu0 0.0
    %478 = vmatprep.subr.mxu0 0.0
    %479 = vmatpush1.msra.mxu0 0.0
    %480 = vmatprep.subr.mxu0 0.0
    %481 = vmatpush1.msra.mxu0 0.0
    %482 = vmatprep.subr.mxu0 0.0
    %483 = vmatpush1.msra.mxu0 0.0
    %484 = vmatprep.subr.mxu0 0.0
    %485 = vmatpush1.msra.mxu0 0.0
    %486 = vmatprep.subr.mxu0 0.0
    %487 = vmatpush1.msra.mxu0 0.0
    %488 = vmatprep.subr.mxu0 0.0
    %489 = vmatpush1.msra.mxu0 0.0
    %490 = vmatprep.subr.mxu0 0.0
    %491 = vmatpush1.msra.mxu0 0.0
    %492 = vmatprep.mubr.f32.mxu0 0.0
    %493 = vmatmul.mubr.f32.gmra.mrb[0].mxu0 %v408
    %v494 = vpop.f32.mrb[0].mxu0
    %v495 = vadd.f32 0.0, %v494
    %v496 = vpop.f32.mrb[0].mxu0
    %497 = vmatprep.mubr.f32.mxu0 0.0
    %498 = vmatmul.mubr.f32.gmra.mrb[0].mxu0 %v409
    %v499 = vpop.f32.mrb[0].mxu0
    %v500 = vadd.f32 0.0, %v499
    %v501 = vpop.f32.mrb[0].mxu0
    %502 = vmatprep.mubr.f32.mxu0 0.0
    %503 = vmatmul.mubr.f32.gmra.mrb[0].mxu0 %v410
    %v504 = vpop.f32.mrb[0].mxu0
    %v505 = vadd.f32 0.0, %v504
    %v506 = vpop.f32.mrb[0].mxu0
    %507 = vmatprep.mubr.f32.mxu0 0.0
    %508 = vmatmul.mubr.f32.gmra.mrb[0].mxu0 %v411
    %v509 = vpop.f32.mrb[0].mxu0
    %v510 = vadd.f32 0.0, %v509
    %v511 = vpop.f32.mrb[0].mxu0
    %512 = vdwg.mxu0
    %513 = vst [vmem:[#allocation5] sm:$0xff] %v495
    %514 = vst [vmem:[#allocation5 + $0x8] sm:$0xff] %v500
    %515 = vst [vmem:[#allocation5 + $0x10] sm:$0xff] %v505
    %516 = vst [vmem:[#allocation5 + $0x18] sm:$0xff] %v510
    // Predicated region
    $region14: #{tpu_custom_call.1} parent=1 // pred_check
      _
    $region15: #{tpu_custom_call.1} parent=1 // pred_check_branch
      %518 = sbr.rel (0) target = $region17
    $region16: #{tpu_custom_call.1} parent=1 // pred_region
      %s520 = ssub.s32 512, 512
      %521 = vsyncadd [#allocation4], %s520
      %s522 = sshll.u32 [#allocation5], 4
      %s523 = int_to_ptr.vmem [resolvable:$true] %s522
      %528 = dma.vmem_to_hbm [thread:$0]  %s523, 512, %s2, [#allocation4], 128, 128, 8
    $region17: #{tpu_custom_call.1} parent=1 // pred_fallthru
      _
    // Predicated region
    $region18: #{tpu_custom_call.1} parent=1 // pred_check
      _
    $region19: #{tpu_custom_call.1} parent=1 // pred_check_branch
      %530 = sbr.rel (0) target = $region21
    $region20: #{tpu_custom_call.1} parent=1 // pred_region
      %531 = dma.done [#allocation4], 512
    $region21: #{tpu_custom_call.1} parent=1 // pred_fallthru
      _
    %532 = vsyncpa [#allocation3], 1
    %533 = vsyncpa [#allocation4], 1

</llo_original>
